<compile_context>
chip_gen: v6e
topology: v6e:2x2x1
jax: 0.10.0
libtpu: 0.0.40
codegen_flags: <defaults>
</compile_context>

<pallas_src>
import numpy as np
import jax
import jax.numpy as jnp
from jax.experimental import pallas as pl
from jax.experimental.pallas import tpu as pltpu


# ---------------------------------------------------------------------------
# Pallas kernel
# ---------------------------------------------------------------------------
def _dino_loss_kernel(scalars_ref, nvalid_ref, teacher_ref, student_ref,
                      center_ref, loss_part_ref, tsum_part_ref,
                      q0_ref, qsum_ref):
    """Grid = (num_batch_tiles, ncrops); one student crop tile per step.

    scalars_ref   : SMEM (2,)  f32   [1/student_temp, 1/teacher_temp]
    nvalid_ref    : SMEM (1,)  i32   true (unpadded) per-crop batch size B
    teacher_ref   : VMEM (2, tb, D)  both teacher crops, this batch tile (raw)
    student_ref   : VMEM (1, tb, D)  student crop v, this batch tile (raw)
    center_ref    : VMEM (1, D)      current center
    loss_part_ref : VMEM (1, 1, D)   lane-resident loss partial for this tile
    tsum_part_ref : VMEM (1, 1, D)   raw teacher row-sum for this tile
    q0_ref        : VMEM (tb, D)     teacher softmax, crop 0 (scratch)
    qsum_ref      : VMEM (tb, D)     q0 + q1 (scratch)
    """
    bi = pl.program_id(0)
    v = pl.program_id(1)

    inv_student_temp = scalars_ref[0]
    inv_teacher_temp = scalars_ref[1]

    # ---- once per batch tile: teacher softmax + raw row-sum + init ----------
    @pl.when(v == 0)
    def _prepare_teacher():
        loss_part_ref[...] = jnp.zeros(loss_part_ref.shape, loss_part_ref.dtype)

        t0 = teacher_ref[0].astype(jnp.float32)          # (tb, D)
        t1 = teacher_ref[1].astype(jnp.float32)          # (tb, D)

        # raw teacher row-sum for the center update (padded rows are zeros)
        tsum_part_ref[0] = jnp.sum(t0 + t1, axis=0, keepdims=True)

        # mask rows past the true batch size (batch was zero-padded to a
        # multiple of the tile size in the wrapper)
        tb = q0_ref.shape[0]
        row_ids = jax.lax.broadcasted_iota(jnp.int32, (tb, 1), 0) + bi * tb
        valid = (row_ids < nvalid_ref[0]).astype(jnp.float32)      # (tb, 1)

        c = center_ref[...].astype(jnp.float32)          # (1, D)

        a0 = (t0 - c) * inv_teacher_temp
        a0 = a0 - jnp.max(a0, axis=-1, keepdims=True)
        e0 = jnp.exp(a0)
        q0 = e0 * pl.reciprocal(jnp.sum(e0, axis=-1, keepdims=True),
                                approx=False) * valid

        a1 = (t1 - c) * inv_teacher_temp
        a1 = a1 - jnp.max(a1, axis=-1, keepdims=True)
        e1 = jnp.exp(a1)
        q1 = e1 * pl.reciprocal(jnp.sum(e1, axis=-1, keepdims=True),
                                approx=False) * valid

        q0_ref[...] = q0.astype(q0_ref.dtype)
        qsum_ref[...] = (q0 + q1).astype(qsum_ref.dtype)

    # ---- per student crop: log-softmax once, lane-resident partial sums -----
    s = student_ref[0].astype(jnp.float32) * inv_student_temp      # (tb, D)
    s = s - jnp.max(s, axis=-1, keepdims=True)
    logz = jnp.log(jnp.sum(jnp.exp(s), axis=-1, keepdims=True))
    neg_logp = logz - s                                            # -log_softmax

    # Teacher crop v is skipped:  v==0 -> q1 (= qsum - q0), v==1 -> q0,
    # v>=2 -> q0 + q1 (= qsum; single scratch load, no extra VPU ops).
    @pl.when(v == 0)
    def _():
        q = qsum_ref[...].astype(jnp.float32) - q0_ref[...].astype(jnp.float32)
        loss_part_ref[0] = loss_part_ref[0] + jnp.sum(
            q * neg_logp, axis=0, keepdims=True)

    @pl.when(v == 1)
    def _():
        q = q0_ref[...].astype(jnp.float32)
        loss_part_ref[0] = loss_part_ref[0] + jnp.sum(
            q * neg_logp, axis=0, keepdims=True)

    @pl.when(v >= 2)
    def _():
        q = qsum_ref[...].astype(jnp.float32)
        loss_part_ref[0] = loss_part_ref[0] + jnp.sum(
            q * neg_logp, axis=0, keepdims=True)


# ---------------------------------------------------------------------------
# Wrapper helpers
# ---------------------------------------------------------------------------
def _round_up_to(x, m):
    return ((x + m - 1) // m) * m


def _vmem_capacity_bytes():
    """Queried VMEM capacity (per TensorCore), with a conservative fallback."""
    try:
        return int(pltpu.get_tpu_info().vmem_capacity_bytes)
    except Exception:
        return 64 * 1024 * 1024      # v7x per-TC VMEM (smallest current chip)


def _choose_batch_tile(b, d, in_bytes, scratch_bytes, ws_budget):
    """Largest sublane-aligned batch tile whose working set fits ws_budget.

    Working-set rows: teacher 2 pipeline buffers x 2 crops (4), student
    2 pipeline buffers (2), q scratch (2) -> d * (6*in_bytes + 2*scratch_bytes)
    bytes per batch row.
    """
    per_row = d * (6 * in_bytes + 2 * scratch_bytes)
    tb_cap = max(8, (int(ws_budget) // per_row) // 8 * 8)
    tb = min(tb_cap, _round_up_to(b, 8))
    if b >= 16:
        # Keep >= 2 batch tiles so the "parallel" axis can feed both
        # TensorCores on v7x (no effect on single-TC v5e/v6e).
        tb = min(tb, _round_up_to((b + 1) // 2, 8))
    return max(8, (tb // 8) * 8)


# ---------------------------------------------------------------------------
# Wrapper
# ---------------------------------------------------------------------------
def dino_loss_forward(student_output, teacher_output, center, *, ncrops,
                      student_temp, teacher_temp, center_momentum,
                      scratch_dtype=None):
    total_s, d = student_output.shape
    total_t, d_t = teacher_output.shape
    assert d == d_t, "student/teacher feature dims must match"
    assert d % 128 == 0, "out_dim must be a multiple of 128 (lane-aligned)"
    b = total_s // ncrops
    assert total_s == ncrops * b, "student rows must be ncrops * batch"
    assert total_t == 2 * b, "teacher_output must hold exactly 2 crops"

    # Keep inputs in their native HBM dtype (bf16 halves DMA bytes);
    # cast to f32 only after each block lands in VMEM (inside the kernel).
    student = student_output.reshape(ncrops, b, d)
    teacher = teacher_output.reshape(2, b, d)
    center = center.astype(jnp.float32)

    if scratch_dtype is None:
        scratch_dtype = (jnp.bfloat16 if teacher.dtype == jnp.bfloat16
                         else jnp.float32)

    in_bytes = max(jnp.dtype(student.dtype).itemsize,
                   jnp.dtype(teacher.dtype).itemsize)
    sc_bytes = jnp.dtype(scratch_dtype).itemsize

    # VMEM budget clamped to the chip's real capacity (v7x: 64 MiB/TC).
    cap = _vmem_capacity_bytes()
    ws_budget = min(cap // 4, 32 * 1024 * 1024)

    tb = _choose_batch_tile(b, d, in_bytes, sc_bytes, ws_budget)
    padded_b = _round_up_to(b, tb)
    nbt = padded_b // tb
    if padded_b != b:
        # Zero-pad; padded rows are masked (zero q) inside the kernel, and the
        # zero teacher rows do not perturb the center row-sum.
        student = jnp.pad(student, ((0, 0), (0, padded_b - b), (0, 0)))
        teacher = jnp.pad(teacher, ((0, 0), (0, padded_b - b), (0, 0)))

    scalars = jnp.array([1.0 / student_temp, 1.0 / teacher_temp],
                        dtype=jnp.float32)
    nvalid = jnp.array([b], dtype=jnp.int32)

    # Full working set: teacher 2x(2*tb*D) + student 2x(tb*D) pipeline buffers,
    # 2 q scratch tiles, center, and the two (1,1,D) outputs (double-buffered).
    working_set = (tb * d * (6 * in_bytes + 2 * sc_bytes)
                   + 2 * d * 4            # center (double-buffered)
                   + 2 * 2 * d * 4)       # two f32 outputs (double-buffered)
    vmem_limit = None
    needed = int(working_set * 1.25) + (2 << 20)   # margin for Mosaic scratch
    if needed > (16 << 20):                        # above smallest default limit
        vmem_limit = int(min(needed, cap - (8 << 20)))

    loss_parts, tsum_parts = pl.pallas_call(
        _dino_loss_kernel,
        out_shape=(jax.ShapeDtypeStruct((nbt, 1, d), jnp.float32),
                   jax.ShapeDtypeStruct((nbt, 1, d), jnp.float32)),
        grid=(nbt, ncrops),
        in_specs=[
            pl.BlockSpec(memory_space=pltpu.MemorySpace.SMEM),       # scalars
            pl.BlockSpec(memory_space=pltpu.MemorySpace.SMEM),       # nvalid
            pl.BlockSpec((2, tb, d), lambda bi, v: (0, bi, 0)),      # teacher
            pl.BlockSpec((1, tb, d), lambda bi, v: (v, bi, 0)),      # student crop v
            pl.BlockSpec((1, d), lambda bi, v: (0, 0)),              # center
        ],
        out_specs=(
            pl.BlockSpec((1, 1, d), lambda bi, v: (bi, 0, 0)),       # loss partials
            pl.BlockSpec((1, 1, d), lambda bi, v: (bi, 0, 0)),       # teacher sums
        ),
        scratch_shapes=[pltpu.VMEM((tb, d), scratch_dtype),          # q (crop 0)
                        pltpu.VMEM((tb, d), scratch_dtype)],         # q0 + q1
        compiler_params=pltpu.CompilerParams(
            dimension_semantics=("parallel", "arbitrary"),
            vmem_limit_bytes=vmem_limit),
    )(scalars, nvalid, teacher, student, center)

    n_loss_terms = 2 * (ncrops - 1)   # 2 teacher crops x (ncrops - 1) student crops
    total_loss = jnp.sum(loss_parts) / (b * n_loss_terms)

    # Center EMA from the fused raw teacher row-sums (tiny combine).
    # TODO(synk): dist.all_reduce / dist.get_world_size() omitted (single device).
    batch_center = jnp.sum(tsum_parts, axis=(0, 1)).reshape(1, d) / (2 * b)
    new_center = center * center_momentum + batch_center * (1.0 - center_momentum)
    return total_loss, new_center


class DINOLoss:
    """JAX/Pallas port of the PyTorch DINOLoss module (forward + center update)."""

    def __init__(self, out_dim, ncrops, warmup_teacher_temp, teacher_temp,
                 warmup_teacher_temp_epochs, nepochs, student_temp=0.1,
                 center_momentum=0.9):
        self.student_temp = student_temp
        self.center_momentum = center_momentum
        self.ncrops = ncrops
        self.center = jnp.zeros((1, out_dim), dtype=jnp.float32)
        self.teacher_temp_schedule = np.concatenate((
            np.linspace(warmup_teacher_temp, teacher_temp,
                        warmup_teacher_temp_epochs),
            np.ones(nepochs - warmup_teacher_temp_epochs) * teacher_temp))

    def forward(self, student_output, teacher_output, epoch):
        temp = float(self.teacher_temp_schedule[epoch])
        loss, new_center = dino_loss_forward(
            student_output, teacher_output, self.center,
            ncrops=self.ncrops, student_temp=self.student_temp,
            teacher_temp=temp, center_momentum=self.center_momentum)
        self.center = new_center
        return loss


# ---------------------------------------------------------------------------
# Pure-JAX reference (for correctness check only)
# ---------------------------------------------------------------------------
def _reference(student_output, teacher_output, center, ncrops, student_temp,
               teacher_temp, center_momentum):
    d = student_output.shape[-1]
    student = (student_output.astype(jnp.float32) / student_temp).reshape(
        ncrops, -1, d)
    q_all = jax.nn.softmax(
        (teacher_output.astype(jnp.float32) - center) / teacher_temp,
        axis=-1).reshape(2, -1, d)
    total, n = 0.0, 0
    for iq in range(2):
        for v in range(ncrops):
            if v == iq:
                continue
            loss = jnp.sum(-q_all[iq] * jax.nn.log_softmax(student[v], axis=-1),
                           axis=-1)
            total = total + loss.mean()
            n += 1
    total = total / n
    batch_center = (jnp.sum(teacher_output.astype(jnp.float32), axis=0,
                            keepdims=True) / teacher_output.shape[0])
    new_center = center * center_momentum + batch_center * (1.0 - center_momentum)
    return total, new_center


# ---------------------------------------------------------------------------
# Main
# ---------------------------------------------------------------------------
if __name__ == "__main__":
    def run_case(ncrops, batch, out_dim, dtype, rtol, atol, seed=0):
        warmup_teacher_temp, teacher_temp = 0.04, 0.07
        warmup_teacher_temp_epochs, nepochs, epoch = 5, 10, 1

        key = jax.random.PRNGKey(seed)
        k1, k2 = jax.random.split(key)
        student_output = jax.random.normal(
            k1, (ncrops * batch, out_dim), dtype=jnp.float32).astype(dtype)
        teacher_output = jax.random.normal(
            k2, (2 * batch, out_dim), dtype=jnp.float32).astype(dtype)

        loss_mod = DINOLoss(out_dim, ncrops, warmup_teacher_temp, teacher_temp,
                            warmup_teacher_temp_epochs, nepochs)
        old_center = loss_mod.center

        loss = loss_mod.forward(student_output, teacher_output, epoch)
        loss = jax.block_until_ready(loss)
        new_center = jax.block_until_ready(loss_mod.center)

        ref_loss, ref_center = _reference(
            student_output, teacher_output, old_center, ncrops,
            loss_mod.student_temp,
            float(loss_mod.teacher_temp_schedule[epoch]),
            loss_mod.center_momentum)
        np.testing.assert_allclose(np.asarray(loss), np.asarray(ref_loss),
                                   rtol=rtol, atol=atol)
        np.testing.assert_allclose(np.asarray(new_center),
                                   np.asarray(ref_center),
                                   rtol=rtol, atol=atol)

    # multi-tile f32 case (2 batch tiles -> exercises the "parallel" bi axis)
    run_case(ncrops=4, batch=16, out_dim=256, dtype=jnp.float32,
             rtol=5e-5, atol=5e-5)
    # non-multiple-of-8 batch -> exercises zero-padding + in-kernel row mask
    run_case(ncrops=3, batch=12, out_dim=128, dtype=jnp.float32,
             rtol=5e-5, atol=5e-5)
    # bf16 inputs (halved HBM bytes + bf16 q scratch) -> loose tolerance
    run_case(ncrops=4, batch=8, out_dim=128, dtype=jnp.bfloat16,
             rtol=3e-2, atol=3e-2)

    print("KERNEL_OK")
</pallas_src>

<mosaic_0001>
module attributes {stable_mosaic.version = 11 : i64} {
  func.func @_dino_loss_kernel(%arg0: i32, %arg1: i32, %arg2: memref<2xf32, #tpu.memory_space<smem>>, %arg3: memref<1xi32, #tpu.memory_space<smem>>, %arg4: memref<2x8x256xf32, #tpu.memory_space<vmem>>, %arg5: memref<1x8x256xf32, #tpu.memory_space<vmem>>, %arg6: memref<1x256xf32, #tpu.memory_space<vmem>>, %arg7: memref<1x1x256xf32, #tpu.memory_space<vmem>>, %arg8: memref<1x1x256xf32, #tpu.memory_space<vmem>>, %arg9: memref<8x256xf32, #tpu.memory_space<vmem>>, %arg10: memref<8x256xf32, #tpu.memory_space<vmem>>) attributes {dimension_semantics = [#tpu.dimension_semantics<parallel>, #tpu.dimension_semantics<arbitrary>], iteration_bounds = array<i64: 2, 4>, scalar_prefetch = 0 : i64, scratch_operands = 2 : i64, tpu.core_type = #tpu.core_type<tc>, window_params = [{transform_indices = @transform_0, window_bounds = array<i64: 2>}, {transform_indices = @transform_1, window_bounds = array<i64: 1>}, {transform_indices = @transform_2, window_bounds = array<i64: 2, 8, 256>}, {transform_indices = @transform_3, window_bounds = array<i64: 1, 8, 256>}, {pipeline_mode = #tpu.pipeline_mode<synchronous>, transform_indices = @transform_4, window_bounds = array<i64: 1, 256>}, {transform_indices = @transform_5, window_bounds = array<i64: 1, 1, 256>}, {transform_indices = @transform_6, window_bounds = array<i64: 1, 1, 256>}]} {
    %c0 = arith.constant 0 : index
    %0 = memref.load %arg2[%c0] : memref<2xf32, #tpu.memory_space<smem>>
    %c1 = arith.constant 1 : index
    %1 = memref.load %arg2[%c1] : memref<2xf32, #tpu.memory_space<smem>>
    %c0_i32 = arith.constant 0 : i32
    %2 = arith.cmpi eq, %arg1, %c0_i32 : i32
    %3 = arith.extui %2 : i1 to i32
    %c0_i32_0 = arith.constant 0 : i32
    %4 = arith.cmpi ne, %3, %c0_i32_0 : i32
    scf.if %4 {
      %cst_9 = arith.constant 0.000000e+00 : f32
      %28 = vector.broadcast %cst_9 : f32 to vector<1x1x256xf32>
      %c0_10 = arith.constant 0 : index
      %c0_11 = arith.constant 0 : index
      %c0_12 = arith.constant 0 : index
      %29 = vector.load %arg7[%c0_10, %c0_11, %c0_12] : memref<1x1x256xf32, #tpu.memory_space<vmem>>, vector<1x1x256xf32>
      tpu.vector_store %arg7[%c0_10, %c0_11, %c0_12], %28 {strides = array<i32>} : memref<1x1x256xf32, #tpu.memory_space<vmem>>, vector<1x1x256xf32>,
      %c0_13 = arith.constant 0 : index
      %c0_14 = arith.constant 0 : index
      %c0_15 = arith.constant 0 : index
      %30 = vector.load %arg4[%c0_13, %c0_14, %c0_15] : memref<2x8x256xf32, #tpu.memory_space<vmem>>, vector<1x8x256xf32>
      %31 = vector.shape_cast %30 : vector<1x8x256xf32> to vector<8x256xf32>
      %c1_16 = arith.constant 1 : index
      %c0_17 = arith.constant 0 : index
      %c0_18 = arith.constant 0 : index
      %32 = vector.load %arg4[%c1_16, %c0_17, %c0_18] : memref<2x8x256xf32, #tpu.memory_space<vmem>>, vector<1x8x256xf32>
      %33 = vector.shape_cast %32 : vector<1x8x256xf32> to vector<8x256xf32>
      %34 = arith.addf %31, %33 : vector<8x256xf32>
      %cst_19 = arith.constant dense<0.000000e+00> : vector<256xf32>
      %35 = vector.multi_reduction <add>, %34, %cst_19 [0] : vector<8x256xf32> to vector<256xf32>
      %36 = vector.shape_cast %35 : vector<256xf32> to vector<1x256xf32>
      %c0_20 = arith.constant 0 : index
      %c0_21 = arith.constant 0 : index
      %c0_22 = arith.constant 0 : index
      %37 = vector.load %arg8[%c0_20, %c0_21, %c0_22] : memref<1x1x256xf32, #tpu.memory_space<vmem>>, vector<1x1x256xf32>
      %38 = vector.shape_cast %37 : vector<1x1x256xf32> to vector<1x256xf32>
      %39 = vector.shape_cast %36 : vector<1x256xf32> to vector<1x1x256xf32>
      tpu.vector_store %arg8[%c0_20, %c0_21, %c0_22], %39 {strides = array<i32>} : memref<1x1x256xf32, #tpu.memory_space<vmem>>, vector<1x1x256xf32>,
      %40 = tpu.iota {dimensions = array<i32: 0>} : vector<8x1xi32>
      %c8_i32 = arith.constant 8 : i32
      %41 = arith.muli %arg0, %c8_i32 : i32
      %42 = vector.broadcast %41 : i32 to vector<8x1xi32>
      %43 = arith.addi %40, %42 : vector<8x1xi32>
      %c0_23 = arith.constant 0 : index
      %44 = memref.load %arg3[%c0_23] : memref<1xi32, #tpu.memory_space<smem>>
      %45 = vector.broadcast %44 : i32 to vector<8x1xi32>
      %46 = arith.cmpi slt, %43, %45 : vector<8x1xi32>
      %47 = arith.extui %46 : vector<8x1xi1> to vector<8x1xi32>
      %48 = arith.sitofp %47 : vector<8x1xi32> to vector<8x1xf32>
      %c0_24 = arith.constant 0 : index
      %c0_25 = arith.constant 0 : index
      %49 = vector.load %arg6[%c0_24, %c0_25] : memref<1x256xf32, #tpu.memory_space<vmem>>, vector<1x256xf32>
      %50 = vector.broadcast %49 : vector<1x256xf32> to vector<8x256xf32>
      %51 = arith.subf %31, %50 : vector<8x256xf32>
      %52 = vector.broadcast %1 : f32 to vector<8x256xf32>
      %53 = arith.mulf %51, %52 : vector<8x256xf32>
      %cst_26 = arith.constant dense<0xFF800000> : vector<8xf32>
      %54 = vector.multi_reduction <maximumf>, %53, %cst_26 [1] : vector<8x256xf32> to vector<8xf32>
      %55 = vector.shape_cast %54 : vector<8xf32> to vector<8x1xf32>
      %56 = vector.broadcast %55 : vector<8x1xf32> to vector<8x256xf32>
      %57 = arith.subf %53, %56 : vector<8x256xf32>
      %58 = math.exp %57 : vector<8x256xf32>
      %cst_27 = arith.constant dense<0.000000e+00> : vector<8xf32>
      %59 = vector.multi_reduction <add>, %58, %cst_27 [1] : vector<8x256xf32> to vector<8xf32>
      %60 = vector.shape_cast %59 : vector<8xf32> to vector<8x1xf32>
      %61 = tpu.reciprocal %60 : vector<8x1xf32> -> vector<8x1xf32>
      %62 = vector.broadcast %61 : vector<8x1xf32> to vector<8x256xf32>
      %63 = arith.mulf %58, %62 : vector<8x256xf32>
      %64 = vector.broadcast %48 : vector<8x1xf32> to vector<8x256xf32>
      %65 = arith.mulf %63, %64 : vector<8x256xf32>
      %66 = vector.broadcast %49 : vector<1x256xf32> to vector<8x256xf32>
      %67 = arith.subf %33, %66 : vector<8x256xf32>
      %68 = vector.broadcast %1 : f32 to vector<8x256xf32>
      %69 = arith.mulf %67, %68 : vector<8x256xf32>
      %cst_28 = arith.constant dense<0xFF800000> : vector<8xf32>
      %70 = vector.multi_reduction <maximumf>, %69, %cst_28 [1] : vector<8x256xf32> to vector<8xf32>
      %71 = vector.shape_cast %70 : vector<8xf32> to vector<8x1xf32>
      %72 = vector.broadcast %71 : vector<8x1xf32> to vector<8x256xf32>
      %73 = arith.subf %69, %72 : vector<8x256xf32>
      %74 = math.exp %73 : vector<8x256xf32>
      %cst_29 = arith.constant dense<0.000000e+00> : vector<8xf32>
      %75 = vector.multi_reduction <add>, %74, %cst_29 [1] : vector<8x256xf32> to vector<8xf32>
      %76 = vector.shape_cast %75 : vector<8xf32> to vector<8x1xf32>
      %77 = tpu.reciprocal %76 : vector<8x1xf32> -> vector<8x1xf32>
      %78 = vector.broadcast %77 : vector<8x1xf32> to vector<8x256xf32>
      %79 = arith.mulf %74, %78 : vector<8x256xf32>
      %80 = vector.broadcast %48 : vector<8x1xf32> to vector<8x256xf32>
      %81 = arith.mulf %79, %80 : vector<8x256xf32>
      %c0_30 = arith.constant 0 : index
      %c0_31 = arith.constant 0 : index
      %82 = vector.load %arg9[%c0_30, %c0_31] : memref<8x256xf32, #tpu.memory_space<vmem>>, vector<8x256xf32>
      tpu.vector_store %arg9[%c0_30, %c0_31], %65 {strides = array<i32>} : memref<8x256xf32, #tpu.memory_space<vmem>>, vector<8x256xf32>,
      %83 = arith.addf %65, %81 : vector<8x256xf32>
      %c0_32 = arith.constant 0 : index
      %c0_33 = arith.constant 0 : index
      %84 = vector.load %arg10[%c0_32, %c0_33] : memref<8x256xf32, #tpu.memory_space<vmem>>, vector<8x256xf32>
      tpu.vector_store %arg10[%c0_32, %c0_33], %83 {strides = array<i32>} : memref<8x256xf32, #tpu.memory_space<vmem>>, vector<8x256xf32>,
    } else {
    }
    %c0_1 = arith.constant 0 : index
    %c0_2 = arith.constant 0 : index
    %c0_3 = arith.constant 0 : index
    %5 = vector.load %arg5[%c0_1, %c0_2, %c0_3] : memref<1x8x256xf32, #tpu.memory_space<vmem>>, vector<1x8x256xf32>
    %6 = vector.shape_cast %5 : vector<1x8x256xf32> to vector<8x256xf32>
    %7 = vector.broadcast %0 : f32 to vector<8x256xf32>
    %8 = arith.mulf %6, %7 : vector<8x256xf32>
    %cst = arith.constant dense<0xFF800000> : vector<8xf32>
    %9 = vector.multi_reduction <maximumf>, %8, %cst [1] : vector<8x256xf32> to vector<8xf32>
    %10 = vector.shape_cast %9 : vector<8xf32> to vector<8x1xf32>
    %11 = vector.broadcast %10 : vector<8x1xf32> to vector<8x256xf32>
    %12 = arith.subf %8, %11 : vector<8x256xf32>
    %13 = math.exp %12 : vector<8x256xf32>
    %cst_4 = arith.constant dense<0.000000e+00> : vector<8xf32>
    %14 = vector.multi_reduction <add>, %13, %cst_4 [1] : vector<8x256xf32> to vector<8xf32>
    %15 = vector.shape_cast %14 : vector<8xf32> to vector<8x1xf32>
    %16 = math.log %15 : vector<8x1xf32>
    %17 = vector.broadcast %16 : vector<8x1xf32> to vector<8x256xf32>
    %18 = arith.subf %17, %12 : vector<8x256xf32>
    %c0_i32_5 = arith.constant 0 : i32
    %19 = arith.cmpi eq, %arg1, %c0_i32_5 : i32
    %20 = arith.extui %19 : i1 to i32
    %c0_i32_6 = arith.constant 0 : i32
    %21 = arith.cmpi ne, %20, %c0_i32_6 : i32
    scf.if %21 {
      %c0_9 = arith.constant 0 : index
      %c0_10 = arith.constant 0 : index
      %28 = vector.load %arg10[%c0_9, %c0_10] : memref<8x256xf32, #tpu.memory_space<vmem>>, vector<8x256xf32>
      %c0_11 = arith.constant 0 : index
      %c0_12 = arith.constant 0 : index
      %29 = vector.load %arg9[%c0_11, %c0_12] : memref<8x256xf32, #tpu.memory_space<vmem>>, vector<8x256xf32>
      %30 = arith.subf %28, %29 : vector<8x256xf32>
      %c0_13 = arith.constant 0 : index
      %c0_14 = arith.constant 0 : index
      %c0_15 = arith.constant 0 : index
      %31 = vector.load %arg7[%c0_13, %c0_14, %c0_15] : memref<1x1x256xf32, #tpu.memory_space<vmem>>, vector<1x1x256xf32>
      %32 = vector.shape_cast %31 : vector<1x1x256xf32> to vector<1x256xf32>
      %33 = arith.mulf %30, %18 : vector<8x256xf32>
      %cst_16 = arith.constant dense<0.000000e+00> : vector<256xf32>
      %34 = vector.multi_reduction <add>, %33, %cst_16 [0] : vector<8x256xf32> to vector<256xf32>
      %35 = vector.shape_cast %34 : vector<256xf32> to vector<1x256xf32>
      %36 = arith.addf %32, %35 : vector<1x256xf32>
      %c0_17 = arith.constant 0 : index
      %c0_18 = arith.constant 0 : index
      %c0_19 = arith.constant 0 : index
      %37 = vector.load %arg7[%c0_17, %c0_18, %c0_19] : memref<1x1x256xf32, #tpu.memory_space<vmem>>, vector<1x1x256xf32>
      %38 = vector.shape_cast %37 : vector<1x1x256xf32> to vector<1x256xf32>
      %39 = vector.shape_cast %36 : vector<1x256xf32> to vector<1x1x256xf32>
      tpu.vector_store %arg7[%c0_17, %c0_18, %c0_19], %39 {strides = array<i32>} : memref<1x1x256xf32, #tpu.memory_space<vmem>>, vector<1x1x256xf32>,
    } else {
    }
    %c1_i32 = arith.constant 1 : i32
    %22 = arith.cmpi eq, %arg1, %c1_i32 : i32
    %23 = arith.extui %22 : i1 to i32
    %c0_i32_7 = arith.constant 0 : i32
    %24 = arith.cmpi ne, %23, %c0_i32_7 : i32
    scf.if %24 {
      %c0_9 = arith.constant 0 : index
      %c0_10 = arith.constant 0 : index
      %28 = vector.load %arg9[%c0_9, %c0_10] : memref<8x256xf32, #tpu.memory_space<vmem>>, vector<8x256xf32>
      %c0_11 = arith.constant 0 : index
      %c0_12 = arith.constant 0 : index
      %c0_13 = arith.constant 0 : index
      %29 = vector.load %arg7[%c0_11, %c0_12, %c0_13] : memref<1x1x256xf32, #tpu.memory_space<vmem>>, vector<1x1x256xf32>
      %30 = vector.shape_cast %29 : vector<1x1x256xf32> to vector<1x256xf32>
      %31 = arith.mulf %28, %18 : vector<8x256xf32>
      %cst_14 = arith.constant dense<0.000000e+00> : vector<256xf32>
      %32 = vector.multi_reduction <add>, %31, %cst_14 [0] : vector<8x256xf32> to vector<256xf32>
      %33 = vector.shape_cast %32 : vector<256xf32> to vector<1x256xf32>
      %34 = arith.addf %30, %33 : vector<1x256xf32>
      %c0_15 = arith.constant 0 : index
      %c0_16 = arith.constant 0 : index
      %c0_17 = arith.constant 0 : index
      %35 = vector.load %arg7[%c0_15, %c0_16, %c0_17] : memref<1x1x256xf32, #tpu.memory_space<vmem>>, vector<1x1x256xf32>
      %36 = vector.shape_cast %35 : vector<1x1x256xf32> to vector<1x256xf32>
      %37 = vector.shape_cast %34 : vector<1x256xf32> to vector<1x1x256xf32>
      tpu.vector_store %arg7[%c0_15, %c0_16, %c0_17], %37 {strides = array<i32>} : memref<1x1x256xf32, #tpu.memory_space<vmem>>, vector<1x1x256xf32>,
    } else {
    }
    %c2_i32 = arith.constant 2 : i32
    %25 = arith.cmpi sge, %arg1, %c2_i32 : i32
    %26 = arith.extui %25 : i1 to i32
    %c0_i32_8 = arith.constant 0 : i32
    %27 = arith.cmpi ne, %26, %c0_i32_8 : i32
    scf.if %27 {
      %c0_9 = arith.constant 0 : index
      %c0_10 = arith.constant 0 : index
      %28 = vector.load %arg10[%c0_9, %c0_10] : memref<8x256xf32, #tpu.memory_space<vmem>>, vector<8x256xf32>
      %c0_11 = arith.constant 0 : index
      %c0_12 = arith.constant 0 : index
      %c0_13 = arith.constant 0 : index
      %29 = vector.load %arg7[%c0_11, %c0_12, %c0_13] : memref<1x1x256xf32, #tpu.memory_space<vmem>>, vector<1x1x256xf32>
      %30 = vector.shape_cast %29 : vector<1x1x256xf32> to vector<1x256xf32>
      %31 = arith.mulf %28, %18 : vector<8x256xf32>
      %cst_14 = arith.constant dense<0.000000e+00> : vector<256xf32>
      %32 = vector.multi_reduction <add>, %31, %cst_14 [0] : vector<8x256xf32> to vector<256xf32>
      %33 = vector.shape_cast %32 : vector<256xf32> to vector<1x256xf32>
      %34 = arith.addf %30, %33 : vector<1x256xf32>
      %c0_15 = arith.constant 0 : index
      %c0_16 = arith.constant 0 : index
      %c0_17 = arith.constant 0 : index
      %35 = vector.load %arg7[%c0_15, %c0_16, %c0_17] : memref<1x1x256xf32, #tpu.memory_space<vmem>>, vector<1x1x256xf32>
      %36 = vector.shape_cast %35 : vector<1x1x256xf32> to vector<1x256xf32>
      %37 = vector.shape_cast %34 : vector<1x256xf32> to vector<1x1x256xf32>
      tpu.vector_store %arg7[%c0_15, %c0_16, %c0_17], %37 {strides = array<i32>} : memref<1x1x256xf32, #tpu.memory_space<vmem>>, vector<1x1x256xf32>,
    } else {
    }
    return
  }
  func.func @transform_0(%arg0: i32, %arg1: i32) -> i32 {
    %c0_i32 = arith.constant 0 : i32
    %c0_i32_0 = arith.constant 0 : i32
    return %c0_i32 : i32
  }
  func.func @transform_1(%arg0: i32, %arg1: i32) -> i32 {
    %c0_i32 = arith.constant 0 : i32
    %c0_i32_0 = arith.constant 0 : i32
    return %c0_i32 : i32
  }
  func.func @transform_2(%arg0: i32, %arg1: i32) -> (i32, i32, i32) {
    %c0_i32 = arith.constant 0 : i32
    %c0_i32_0 = arith.constant 0 : i32
    %c0_i32_1 = arith.constant 0 : i32
    return %c0_i32, %arg0, %c0_i32_0 : i32, i32, i32
  }
  func.func @transform_3(%arg0: i32, %arg1: i32) -> (i32, i32, i32) {
    %c0_i32 = arith.constant 0 : i32
    %c0_i32_0 = arith.constant 0 : i32
    return %arg1, %arg0, %c0_i32 : i32, i32, i32
  }
  func.func @transform_4(%arg0: i32, %arg1: i32) -> (i32, i32) {
    %c0_i32 = arith.constant 0 : i32
    %c0_i32_0 = arith.constant 0 : i32
    %c0_i32_1 = arith.constant 0 : i32
    return %c0_i32, %c0_i32_0 : i32, i32
  }
  func.func @transform_5(%arg0: i32, %arg1: i32) -> (i32, i32, i32) {
    %c0_i32 = arith.constant 0 : i32
    %c0_i32_0 = arith.constant 0 : i32
    %c0_i32_1 = arith.constant 0 : i32
    return %arg0, %c0_i32, %c0_i32_0 : i32, i32, i32
  }
  func.func @transform_6(%arg0: i32, %arg1: i32) -> (i32, i32, i32) {
    %c0_i32 = arith.constant 0 : i32
    %c0_i32_0 = arith.constant 0 : i32
    %c0_i32_1 = arith.constant 0 : i32
    return %arg0, %c0_i32, %c0_i32_0 : i32, i32, i32
  }
}

</mosaic_0001>

<llo_original>
// kernel: tpu_custom_call.1
$region0: #{tpu_custom_call.1}
  #allocation0 [shape = 'u32[]', space=smem, size = 0x4, offset = 0x4, fixed_abs, tag = 'smem constant byte address 0x4 - core index']
  #allocation1 [shape = 'u32[144,128]{1,0:T(1,128)}', space=vmem, size = 0x12000, scoped, tag = 'internal scratch']
  #allocation2 [shape = 'f32[8,256]{1,0:T(8,128)}', space=vmem, size = 0x2000, scoped, tag = 'scratch operand']
  #allocation3 [shape = 'f32[8,256]{1,0:T(8,128)}', space=vmem, size = 0x2000, scoped, tag = 'scratch operand']
  #allocation4 [shape = 's32[1]{0:T(128)S(6)}', space=smem, size = 0x200, scoped, tag = 'scoped memory for tpu_custom_call.1']
  %s0 = inlined_call_operand.vmem [shape: f32[2], index: 0, kind: input, shape index: {}]
  %s1 = inlined_call_operand.<no memory space> [shape: s32[1], index: 1, kind: input, shape index: {}]
  %s2 = inlined_call_operand.hbm [shape: f32[2,16,256], index: 2, kind: input, shape index: {}]
  %s3 = inlined_call_operand.hbm [shape: f32[4,16,256], index: 3, kind: input, shape index: {}]
  %s4 = inlined_call_operand.vmem [shape: f32[1,256], index: 4, kind: input, shape index: {}]
  %s5 = inlined_call_operand.hbm [shape: f32[2,1,256], index: 5, kind: output, shape index: {0}]
  %s6 = inlined_call_operand.hbm [shape: f32[2,1,256], index: 6, kind: output, shape index: {1}]
  %7 = xla_tuple %s5, %s6
  %s8 = sld [smem:[#allocation0]]
  $region89: #{tpu_custom_call.1} parent=0
    _
  %s10 = ssub.s32 1, %s8
  %s11 = scalar_select 0, %s10, %s8
  %12 = sst [smem:[#allocation4]] %s1
  $region1: #{tpu_custom_call.1} parent=0
    #allocation5 [shape = 'u8[512]{0}', space=smem, size = 0x200, scoped, tag = 'input window, operand 0, single buffered']
    #allocation6 [shape = 's32[2]{0}', space=sflag, size = 0x8, scoped, tag = 'scoped memory for tpu_custom_call.1']
    #allocation7 [shape = 's32[2]{0}', space=sflag, size = 0x8, scoped, tag = 'scoped memory for tpu_custom_call.1']
    #allocation8 [shape = 's32[2]{0}', space=sflag, size = 0x8, scoped, tag = 'scoped memory for tpu_custom_call.1']
    #allocation9 [shape = 'u8[32768]{0}', space=vmem, size = 0x8000, scoped, tag = 'input window, operand 2']
    #allocation10 [shape = 'u8[16384]{0}', space=vmem, size = 0x4000, scoped, tag = 'input window, operand 3']
    #allocation11 [shape = 's32[2]{0}', space=sflag, size = 0x8, scoped, tag = 'scoped memory for tpu_custom_call.1']
    #allocation12 [shape = 'u8[2048]{0}', space=vmem, size = 0x800, scoped, tag = 'output window, operand 0']
    #allocation13 [shape = 'u8[2048]{0}', space=vmem, size = 0x800, scoped, tag = 'output window, operand 1']
    #allocation14 [shape = 's32[2]{0}', space=sflag, size = 0x8, scoped, tag = 'scoped memory for tpu_custom_call.1']
    %13 = vsyncpa [#allocation8], 0
    %14 = vsyncpa [#allocation6], 0
    %s15 = scalar_lea.sflag [#allocation6], 1
    %16 = vsyncpa %s15, 0
    %17 = vsyncpa [#allocation11], 0
    %s18 = scalar_lea.sflag [#allocation11], 1
    %19 = vsyncpa %s18, 0
    %20 = vsyncpa [#allocation7], 0
    %s21 = scalar_lea.sflag [#allocation7], 1
    %22 = vsyncpa %s21, 0
    %23 = vsyncpa [#allocation14], 0
    %s24 = scalar_lea.sflag [#allocation14], 1
    %25 = vsyncpa %s24, 0
    loop: start=0, step=1, limit=10
    $region2: #{tpu_custom_call.1} parent=1 // loop_pre_header
      _
    $region3: #{tpu_custom_call.1} parent=1 // loop_header
      %s27 = sphi 0, %s31
      %p28 = scmp.ge.s32.totalorder %s27, 10
      %s34 = sphi 0, %s46
      %s35 = sphi 0, %s42
      %s36 = sphi 0, %s34
      %s37 = sphi 0, %s35
      %s38 = sphi 0, %s36
      %s39 = sphi 0, %s37
      %s47 = sphi 0, %s47
      %s49 = sphi 0, %s47
      %s50 = sphi 0, %s49
      %s64 = sphi 0, %s50
      %s68 = sphi 0, %s68
      %s70 = sphi 0, %s68
      %s71 = sphi 0, %s70
      %s85 = sphi 0, %s71
      %s91 = sphi 0, %s93
      %s94 = sphi 0, %s91
      %s95 = sphi 0, %s94
      %s111 = sphi 0, %s95
      %s119 = sphi 0, %s121
      %s122 = sphi 0, %s119
      %s123 = sphi 0, %s122
      %s139 = sphi 0, %s123
      %s143 = sphi 0, %s143
      %s145 = sphi 0, %s143
      %s146 = sphi 0, %s145
      %s160 = sphi 0, %s146
      %s166 = sphi 0, %s168
      %s169 = sphi 0, %s166
      %s170 = sphi 0, %s169
      %s186 = sphi 0, %s170
      %s192 = sphi 0, %s194
      %s195 = sphi 0, %s192
      %s196 = sphi 0, %s195
      %s212 = sphi 0, %s196
    $region4: #{tpu_custom_call.1} parent=1 // loop_header_branch
      %30 = sbr.rel (%p28) target = $region8
    $region5: #{tpu_custom_call.1} parent=1 // loop_body
      %s32 = ssub.s32 %s27, 1
      %s33 = ssub.s32 %s27, 2
      %s40 = sadd.s32 1, %s35
      %p41 = scmp.ge.s32.totalorder %s40, 4
      %s42 = scalar_select %p41, 0, %s40
      %s43 = sadd.s32 1, %s34
      %s44 = scalar_select %p41, %s43, %s34
      %p45 = scmp.ge.s32.totalorder %s44, 2
      %s46 = scalar_select %p45, 0, %s44
      %s48 = sadd.s32 %s47, 1
      %p51 = scmp.eq.s32.totalorder %s27, 7
      %p52 = scmp.ne.s32.totalorder %s47, %s49
      %p53 = scmp.eq.s32.totalorder %s27, 0
      %p54 = por %p52, %p53
      %p55 = scmp.ne.s32.totalorder %s47, %s49
      %p56 = scmp.eq.s32.totalorder %s32, 7
      %p57 = por %p55, %p56
      %p58 = scmp.ne.s32.totalorder %s49, %s50
      %p59 = scmp.eq.s32.totalorder %s32, 0
      %p60 = por %p58, %p59
      %p61 = scmp.ne.s32.totalorder %s49, %s50
      %p62 = scmp.eq.s32.totalorder %s33, 7
      %p63 = por %p61, %p62
      %p65 = scmp.ne.s32.totalorder %s50, %s64
      %p66 = scmp.eq.s32.totalorder %s33, 0
      %p67 = por %p65, %p66
      %s69 = sadd.s32 %s68, 1
      %p72 = scmp.eq.s32.totalorder %s27, 7
      %p73 = scmp.ne.s32.totalorder %s68, %s70
      %p74 = scmp.eq.s32.totalorder %s27, 0
      %p75 = por %p73, %p74
      %p76 = scmp.ne.s32.totalorder %s68, %s70
      %p77 = scmp.eq.s32.totalorder %s32, 7
      %p78 = por %p76, %p77
      %p79 = scmp.ne.s32.totalorder %s70, %s71
      %p80 = scmp.eq.s32.totalorder %s32, 0
      %p81 = por %p79, %p80
      %p82 = scmp.ne.s32.totalorder %s70, %s71
      %p83 = scmp.eq.s32.totalorder %s33, 7
      %p84 = por %p82, %p83
      %p86 = scmp.ne.s32.totalorder %s71, %s85
      %p87 = scmp.eq.s32.totalorder %s33, 0
      %p88 = por %p86, %p87
      %s89 = ssub.s32 %s34, %s46
      %p90 = scmp.eq.s32.totalorder %s89, 0
      %s92 = sadd.s32 %s91, 1
      %s93 = scalar_select %p90, %s91, %s92
      %p96 = pneg %p90
      %p97 = scmp.eq.s32.totalorder %s27, 7
      %p98 = por %p96, %p97
      %p99 = scmp.ne.s32.totalorder %s91, %s94
      %p100 = scmp.eq.s32.totalorder %s27, 0
      %p101 = por %p99, %p100
      %p102 = scmp.ne.s32.totalorder %s91, %s94
      %p103 = scmp.eq.s32.totalorder %s32, 7
      %p104 = por %p102, %p103
      %p105 = scmp.ne.s32.totalorder %s94, %s95
      %p106 = scmp.eq.s32.totalorder %s32, 0
      %p107 = por %p105, %p106
      %p108 = scmp.ne.s32.totalorder %s94, %s95
      %p109 = scmp.eq.s32.totalorder %s33, 7
      %p110 = por %p108, %p109
      %p112 = scmp.ne.s32.totalorder %s95, %s111
      %p113 = scmp.eq.s32.totalorder %s33, 0
      %p114 = por %p112, %p113
      %s115 = ssub.s32 %s35, %s42
      %s116 = ssub.s32 %s34, %s46
      %s117 = sor.u32 %s115, %s116
      %p118 = scmp.eq.s32.totalorder %s117, 0
      %s120 = sadd.s32 %s119, 1
      %s121 = scalar_select %p118, %s119, %s120
      %p124 = pneg %p118
      %p125 = scmp.eq.s32.totalorder %s27, 7
      %p126 = por %p124, %p125
      %p127 = scmp.ne.s32.totalorder %s119, %s122
      %p128 = scmp.eq.s32.totalorder %s27, 0
      %p129 = por %p127, %p128
      %p130 = scmp.ne.s32.totalorder %s119, %s122
      %p131 = scmp.eq.s32.totalorder %s32, 7
      %p132 = por %p130, %p131
      %p133 = scmp.ne.s32.totalorder %s122, %s123
      %p134 = scmp.eq.s32.totalorder %s32, 0
      %p135 = por %p133, %p134
      %p136 = scmp.ne.s32.totalorder %s122, %s123
      %p137 = scmp.eq.s32.totalorder %s33, 7
      %p138 = por %p136, %p137
      %p140 = scmp.ne.s32.totalorder %s123, %s139
      %p141 = scmp.eq.s32.totalorder %s33, 0
      %p142 = por %p140, %p141
      %s144 = sadd.s32 %s143, 1
      %p147 = scmp.eq.s32.totalorder %s27, 7
      %p148 = scmp.ne.s32.totalorder %s143, %s145
      %p149 = scmp.eq.s32.totalorder %s27, 0
      %p150 = por %p148, %p149
      %p151 = scmp.ne.s32.totalorder %s143, %s145
      %p152 = scmp.eq.s32.totalorder %s32, 7
      %p153 = por %p151, %p152
      %p154 = scmp.ne.s32.totalorder %s145, %s146
      %p155 = scmp.eq.s32.totalorder %s32, 0
      %p156 = por %p154, %p155
      %p157 = scmp.ne.s32.totalorder %s145, %s146
      %p158 = scmp.eq.s32.totalorder %s33, 7
      %p159 = por %p157, %p158
      %p161 = scmp.ne.s32.totalorder %s146, %s160
      %p162 = scmp.eq.s32.totalorder %s33, 0
      %p163 = por %p161, %p162
      %s164 = ssub.s32 %s34, %s46
      %p165 = scmp.eq.s32.totalorder %s164, 0
      %s167 = sadd.s32 %s166, 1
      %s168 = scalar_select %p165, %s166, %s167
      %p171 = pneg %p165
      %p172 = scmp.eq.s32.totalorder %s27, 7
      %p173 = por %p171, %p172
      %p174 = scmp.ne.s32.totalorder %s166, %s169
      %p175 = scmp.eq.s32.totalorder %s27, 0
      %p176 = por %p174, %p175
      %p177 = scmp.ne.s32.totalorder %s166, %s169
      %p178 = scmp.eq.s32.totalorder %s32, 7
      %p179 = por %p177, %p178
      %p180 = scmp.ne.s32.totalorder %s169, %s170
      %p181 = scmp.eq.s32.totalorder %s32, 0
      %p182 = por %p180, %p181
      %p183 = scmp.ne.s32.totalorder %s169, %s170
      %p184 = scmp.eq.s32.totalorder %s33, 7
      %p185 = por %p183, %p184
      %p187 = scmp.ne.s32.totalorder %s170, %s186
      %p188 = scmp.eq.s32.totalorder %s33, 0
      %p189 = por %p187, %p188
      %s190 = ssub.s32 %s34, %s46
      %p191 = scmp.eq.s32.totalorder %s190, 0
      %s193 = sadd.s32 %s192, 1
      %s194 = scalar_select %p191, %s192, %s193
      %p197 = pneg %p191
      %p198 = scmp.eq.s32.totalorder %s27, 7
      %p199 = por %p197, %p198
      %p200 = scmp.ne.s32.totalorder %s192, %s195
      %p201 = scmp.eq.s32.totalorder %s27, 0
      %p202 = por %p200, %p201
      %p203 = scmp.ne.s32.totalorder %s192, %s195
      %p204 = scmp.eq.s32.totalorder %s32, 7
      %p205 = por %p203, %p204
      %p206 = scmp.ne.s32.totalorder %s195, %s196
      %p207 = scmp.eq.s32.totalorder %s32, 0
      %p208 = por %p206, %p207
      %p209 = scmp.ne.s32.totalorder %s195, %s196
      %p210 = scmp.eq.s32.totalorder %s33, 7
      %p211 = por %p209, %p210
      %p213 = scmp.ne.s32.totalorder %s196, %s212
      %p214 = scmp.eq.s32.totalorder %s33, 0
      %p215 = por %p213, %p214
      %p216 = scmp.le.s32.totalorder 1, %s27
      %p217 = scmp.lt.s32.totalorder %s27, 9
      %p218 = pnand %p216, %p217
      %p219 = pneg %p218
      // Predicated region
      $region9: #{tpu_custom_call.1} parent=5 // pred_check
        _
      $region10: #{tpu_custom_call.1} parent=5 // pred_check_branch
        %221 = sbr.rel (%p218) target = $region12
      $region11: #{tpu_custom_call.1} parent=5 // pred_region
        %s222 = ssub.s32 %s27, 1
        // Predicated region
        $region13: #{tpu_custom_call.1} parent=11 // pred_check
          %p223 = pneg %p60
        $region14: #{tpu_custom_call.1} parent=11 // pred_check_branch
          %225 = sbr.rel (%p223) target = $region16
        $region15: #{tpu_custom_call.1} parent=11 // pred_region
          %s227 = ssub.s32 16, 16
          %228 = vsyncadd [#allocation8], %s227
          %s230 = sshll.u32 %s0, 4
          %s231 = int_to_ptr.vmem [resolvable:$true] %s230
          %233 = dma.vmem_to_smem %s231, 16, [#allocation5], [#allocation8]
        $region16: #{tpu_custom_call.1} parent=11 // pred_fallthru
          _
        // Predicated region
        $region17: #{tpu_custom_call.1} parent=11 // pred_check
          %p234 = pneg %p81
        $region18: #{tpu_custom_call.1} parent=11 // pred_check_branch
          %236 = sbr.rel (%p234) target = $region20
        $region19: #{tpu_custom_call.1} parent=11 // pred_region
          _
        $region20: #{tpu_custom_call.1} parent=11 // pred_fallthru
          _
        // Predicated region
        $region21: #{tpu_custom_call.1} parent=11 // pred_check
          %p237 = pneg %p156
        $region22: #{tpu_custom_call.1} parent=11 // pred_check_branch
          %239 = sbr.rel (%p237) target = $region24
        $region23: #{tpu_custom_call.1} parent=11 // pred_region
          _
        $region24: #{tpu_custom_call.1} parent=11 // pred_fallthru
          _
      $region12: #{tpu_custom_call.1} parent=5 // pred_fallthru
        _
      %p240 = scmp.lt.s32.totalorder %s27, 8
      // Predicated region
      $region25: #{tpu_custom_call.1} parent=5 // pred_check
        %p241 = pneg %p240
      $region26: #{tpu_custom_call.1} parent=5 // pred_check_branch
        %243 = sbr.rel (%p241) target = $region28
      $region27: #{tpu_custom_call.1} parent=5 // pred_region
        // Predicated region
        $region29: #{tpu_custom_call.1} parent=27 // pred_check
          %p244 = pneg %p101
        $region30: #{tpu_custom_call.1} parent=27 // pred_check_branch
          %246 = sbr.rel (%p244) target = $region32
        $region31: #{tpu_custom_call.1} parent=27 // pred_region
          %s247 = sand.u32 %s91, 1
          %s248 = scalar_lea.sflag [#allocation6], %s247
          %s249 = sand.u32 %s91, 1
          %s250 = smul.addr %s249, 32
          %s251 = scalar_lea.vmem [#allocation9], %s250
          %s253 = ssub.s32 512, 512
          %254 = vsyncadd %s248, %s253
          %s255 = smul.addr %s34, 2
          %s256 = smul.addr %s255, 128
          %s257 = scalar_lea.hbm %s2, %s256
          %s258 = sshll.u32 %s251, 4
          %s259 = int_to_ptr.vmem [resolvable:$true] %s258
          %264 = dma.hbm_to_vmem [thread:$0]  %s257, 512, %s259, %s248, 512, 256, 16
        $region32: #{tpu_custom_call.1} parent=27 // pred_fallthru
          _
        // Predicated region
        $region33: #{tpu_custom_call.1} parent=27 // pred_check
          %p265 = pneg %p129
        $region34: #{tpu_custom_call.1} parent=27 // pred_check_branch
          %267 = sbr.rel (%p265) target = $region36
        $region35: #{tpu_custom_call.1} parent=27 // pred_region
          %s268 = sand.u32 %s119, 1
          %s269 = scalar_lea.sflag [#allocation11], %s268
          %s270 = sand.u32 %s119, 1
          %s271 = smul.addr %s270, 16
          %s272 = scalar_lea.vmem [#allocation10], %s271
          %s274 = ssub.s32 256, 256
          %275 = vsyncadd %s269, %s274
          %s276 = smul.addr %s34, 2
          %s277 = smul.addr %s35, 4
          %s278 = sadd.s32 %s276, %s277
          %s279 = smul.addr %s278, 128
          %s280 = scalar_lea.hbm %s3, %s279
          %s282 = sshll.u32 %s272, 4
          %s283 = int_to_ptr.vmem [resolvable:$true] %s282
          %285 = dma.hbm_to_vmem [thread:$0]  %s280, 256, %s283, %s269
        $region36: #{tpu_custom_call.1} parent=27 // pred_fallthru
          _
      $region28: #{tpu_custom_call.1} parent=5 // pred_fallthru
        _
      %p286 = scmp.le.s32.totalorder 1, %s27
      %p287 = scmp.lt.s32.totalorder %s27, 9
      %p288 = pnand %p286, %p287
      %p289 = pneg %p288
      // Predicated region
      $region37: #{tpu_custom_call.1} parent=5 // pred_check
        _
      $region38: #{tpu_custom_call.1} parent=5 // pred_check_branch
        %291 = sbr.rel (%p288) target = $region40
      $region39: #{tpu_custom_call.1} parent=5 // pred_region
        %s292 = ssub.s32 %s27, 1
        // Predicated region
        $region41: #{tpu_custom_call.1} parent=39 // pred_check
          %p293 = pneg %p60
        $region42: #{tpu_custom_call.1} parent=39 // pred_check_branch
          %295 = sbr.rel (%p293) target = $region44
        $region43: #{tpu_custom_call.1} parent=39 // pred_region
          %296 = dma.done [#allocation8], 16
        $region44: #{tpu_custom_call.1} parent=39 // pred_fallthru
          _
        %s297 = sand.u32 %s94, 1
        %s298 = scalar_lea.sflag [#allocation6], %s297
        %s299 = sand.u32 %s94, 1
        %s300 = smul.addr %s299, 32
        %s301 = scalar_lea.vmem [#allocation9], %s300
        // Predicated region
        $region45: #{tpu_custom_call.1} parent=39 // pred_check
          %p302 = pneg %p107
        $region46: #{tpu_custom_call.1} parent=39 // pred_check_branch
          %304 = sbr.rel (%p302) target = $region48
        $region47: #{tpu_custom_call.1} parent=39 // pred_region
          %305 = dma.done %s298, 512
        $region48: #{tpu_custom_call.1} parent=39 // pred_fallthru
          _
        %s306 = sand.u32 %s122, 1
        %s307 = scalar_lea.sflag [#allocation11], %s306
        %s308 = sand.u32 %s122, 1
        %s309 = smul.addr %s308, 16
        %s310 = scalar_lea.vmem [#allocation10], %s309
        // Predicated region
        $region49: #{tpu_custom_call.1} parent=39 // pred_check
          %p311 = pneg %p135
        $region50: #{tpu_custom_call.1} parent=39 // pred_check_branch
          %313 = sbr.rel (%p311) target = $region52
        $region51: #{tpu_custom_call.1} parent=39 // pred_region
          %314 = dma.done %s307, 256
        $region52: #{tpu_custom_call.1} parent=39 // pred_fallthru
          _
        %315 = sfence
        %p316 = pneg %p60
        %p317 = pneg %p57
        %p318 = pneg %p81
        %p319 = pneg %p78
        %s320 = sand.u32 %s94, 1
        %s321 = scalar_lea.sflag [#allocation6], %s320
        %s322 = sand.u32 %s94, 1
        %s323 = smul.addr %s322, 32
        %s324 = scalar_lea.vmem [#allocation9], %s323
        %p325 = pneg %p107
        %p326 = pneg %p104
        %s327 = sand.u32 %s122, 1
        %s328 = scalar_lea.sflag [#allocation11], %s327
        %s329 = sand.u32 %s122, 1
        %s330 = smul.addr %s329, 16
        %s331 = scalar_lea.vmem [#allocation10], %s330
        %p332 = pneg %p135
        %p333 = pneg %p132
        %p334 = pneg %p156
        %p335 = pneg %p153
        %p336 = pneg %p182
        %p337 = pneg %p179
        %s338 = sand.u32 %s169, 1
        %s339 = scalar_lea.sflag [#allocation7], %s338
        %s340 = sand.u32 %s169, 1
        %s341 = smul.addr %s340, 2
        %s342 = scalar_lea.vmem [#allocation12], %s341
        %p343 = pneg %p208
        %p344 = pneg %p205
        %s345 = sand.u32 %s195, 1
        %s346 = scalar_lea.sflag [#allocation14], %s345
        %s347 = sand.u32 %s195, 1
        %s348 = smul.addr %s347, 2
        %s349 = scalar_lea.vmem [#allocation13], %s348
        %s350 = sld [smem:[#allocation5]]
        %s351 = sld [smem:[#allocation5 + $0x1]]
        %p352 = scmp.eq.s32.totalorder %s37, 0
        // Predicated region
        $region53: #{tpu_custom_call.1} parent=39 // pred_check
          %p353 = pneg %p352
        $region54: #{tpu_custom_call.1} parent=39 // pred_check_branch
          %355 = sbr.rel (%p353) target = $region56
        $region55: #{tpu_custom_call.1} parent=39 // pred_region
          %v356 = vlaneseq
          %vm357 = vcmp.ge.s32.totalorder %v356, 0
          %vm358 = vcmp.lt.s32.totalorder %v356, 256
          %vm359 = vmand %vm357, %vm358
          %360 = vst.msk [vmem:[%s342] sm:$0x3] %vm359, 0.0
          %v361 = vld [vmem:[%s301] sm:$0xff]
          %v362 = vld [vmem:[%s301 + $0x8] sm:$0xff]
          %s363 = scalar_lea.vmem %s301, 16 [#allocation9]
          %v364 = vld [vmem:[%s363] sm:$0xff]
          %v365 = vld [vmem:[%s363 + $0x8] sm:$0xff]
          %v366 = vadd.f32 %v361, %v364
          %v367 = vadd.f32 %v362, %v365
          %v368 = vrot.slane %v366, 4
          %v369 = vadd.f32 %v366, %v368
          %v370 = vrot.slane %v369, 2
          %v371 = vadd.f32 %v369, %v370
          %v372 = vrot.slane %v371, 1
          %v373 = vadd.f32 %v371, %v372
          %v374 = vrot.slane %v367, 4
          %v375 = vadd.f32 %v367, %v374
          %v376 = vrot.slane %v375, 2
          %v377 = vadd.f32 %v375, %v376
          %v378 = vrot.slane %v377, 1
          %v379 = vadd.f32 %v377, %v378
          %v382 = vcombine.low %v373, %v379
          %v384 = vunpack.c.l.s4 1966171168
          %v385 = vunpack.c.0.s8 %v384
          %v386 = vlaneseq
          %v387 = vshrl.u32 %v386, 7
          %v388 = vsub.s32 %v385, %v387
          %v389 = vrot.slane %v382, %v388
          %v391 = vunpack.c.l.s4 1966171168
          %v392 = vunpack.c.0.s8 %v391
          %v393 = vlaneseq
          %v394 = vshrl.u32 %v393, 7
          %v395 = vsub.s32 %v392, %v394
          %v396 = vrot.slane %v389, %v395
          %398 = vst.msk [vmem:[%s349] sm:$0x3] %vm359, %v396
          %v399 = vlaneseq
          %v400 = vshrl.u32 %v399, 7
          %s401 = smul.u32 %s36, 8
          %v402 = vstv %s401
          %v403 = vadd.s32 %v400, %v402
          %s404 = sld [smem:[#allocation4]]
          %v405 = vstv %s404
          %vm406 = vcmp.lt.s32.totalorder %v403, %v405
          %v407 = vsel %vm406, 1, 0
          %v408 = vcvt.s32.f32 %v407
          %v409 = vld [vmem:[%s4] sm:$0x3]
          %v411 = vlaneseq
          %v412 = vshrl.u32 %v411, 7
          %v413 = vsub.s32 0, %v412
          %v414 = vrot.slane %v409, %v413
          %v415 = vlaneseq
          %v416 = vshrl.u32 %v415, 7
          %v417 = vsub.s32 1, %v416
          %v418 = vrot.slane %v409, %v417
          %v421 = vsub.f32 %v361, %v414
          %v422 = vsub.f32 %v362, %v418
          %v423 = vstv %s351
          %v424 = vmul.f32 %v421, %v423
          %v425 = vmul.f32 %v422, %v423
          %v426 = vmax.f32 %v424, %v425
          %427 = vmax.xlane.f32.xlu0 %v426
          %v428 = vpop.xlane.xlu0 %427
          %v429 = vsub.f32 %v424, %v428
          %v430 = vsub.f32 %v425, %v428
          %v431 = vmul.f32 %v429, 1.442695
          %v432 = vpow.pop %v431
          %v433 = vmul.f32 %v430, 1.442695
          %v434 = vpow.pop %v433
          %v435 = vadd.f32 %v432, %v434
          %436 = vadd.xlane.f32.xlu0 %v435
          %v437 = vpop.xlane.xlu0 %436
          %v438 = vrcp.pop %v437
          %v439 = vmul.f32 %v432, %v438
          %v440 = vmul.f32 %v434, %v438
          %v441 = vmul.f32 %v439, %v408
          %v442 = vmul.f32 %v440, %v408
          %v443 = vsub.f32 %v364, %v414
          %v444 = vsub.f32 %v365, %v418
          %v445 = vmul.f32 %v443, %v423
          %v446 = vmul.f32 %v444, %v423
          %v447 = vmax.f32 %v445, %v446
          %448 = vmax.xlane.f32.xlu0 %v447
          %v449 = vpop.xlane.xlu0 %448
          %v450 = vsub.f32 %v445, %v449
          %v451 = vsub.f32 %v446, %v449
          %v452 = vmul.f32 %v450, 1.442695
          %v453 = vpow.pop %v452
          %v454 = vmul.f32 %v451, 1.442695
          %v455 = vpow.pop %v454
          %v456 = vadd.f32 %v453, %v455
          %457 = vadd.xlane.f32.xlu0 %v456
          %v458 = vpop.xlane.xlu0 %457
          %v459 = vrcp.pop %v458
          %v460 = vmul.f32 %v453, %v459
          %v461 = vmul.f32 %v455, %v459
          %v462 = vmul.f32 %v460, %v408
          %v463 = vmul.f32 %v461, %v408
          %464 = vst [vmem:[#allocation2] sm:$0xff] %v441
          %465 = vst [vmem:[#allocation2 + $0x8] sm:$0xff] %v442
          %v466 = vadd.f32 %v441, %v462
          %v467 = vadd.f32 %v442, %v463
          %468 = vst [vmem:[#allocation3] sm:$0xff] %v466
          %469 = vst [vmem:[#allocation3 + $0x8] sm:$0xff] %v467
        $region56: #{tpu_custom_call.1} parent=39 // pred_fallthru
          _
        %v470 = vld [vmem:[%s310] sm:$0xff]
        %v471 = vld [vmem:[%s310 + $0x8] sm:$0xff]
        %v472 = vstv %s350
        %v473 = vmul.f32 %v470, %v472
        %v474 = vmul.f32 %v471, %v472
        %v475 = vmax.f32 %v473, %v474
        %476 = vmax.xlane.f32.xlu0 %v475
        %v477 = vpop.xlane.xlu0 %476
        %v478 = vsub.f32 %v473, %v477
        %v479 = vsub.f32 %v474, %v477
        %v480 = vmul.f32 %v478, 1.442695
        %v481 = vpow.pop %v480
        %v482 = vmul.f32 %v479, 1.442695
        %v483 = vpow.pop %v482
        %v484 = vadd.f32 %v481, %v483
        %485 = vadd.xlane.f32.xlu0 %v484
        %v486 = vpop.xlane.xlu0 %485
        %v487 = vlog2.pop %v486
        %v488 = vmul.f32 %v487, 0.6931472
        %v489 = vsub.f32 %v488, %v478
        %v490 = vsub.f32 %v488, %v479
        // Predicated region
        $region57: #{tpu_custom_call.1} parent=39 // pred_check
          %p491 = pneg %p352
        $region58: #{tpu_custom_call.1} parent=39 // pred_check_branch
          %493 = sbr.rel (%p491) target = $region60
        $region59: #{tpu_custom_call.1} parent=39 // pred_region
          %v494 = vld [vmem:[#allocation3] sm:$0xff]
          %v495 = vld [vmem:[#allocation3 + $0x8] sm:$0xff]
          %v496 = vld [vmem:[#allocation2] sm:$0xff]
          %v497 = vld [vmem:[#allocation2 + $0x8] sm:$0xff]
          %v498 = vsub.f32 %v494, %v496
          %v499 = vsub.f32 %v495, %v497
          %v500 = vld [vmem:[%s342] sm:$0x3]
          %v501 = vmul.f32 %v498, %v489
          %v502 = vmul.f32 %v499, %v490
          %v503 = vrot.slane %v501, 4
          %v504 = vadd.f32 %v501, %v503
          %v505 = vrot.slane %v504, 2
          %v506 = vadd.f32 %v504, %v505
          %v507 = vrot.slane %v506, 1
          %v508 = vadd.f32 %v506, %v507
          %v509 = vrot.slane %v502, 4
          %v510 = vadd.f32 %v502, %v509
          %v511 = vrot.slane %v510, 2
          %v512 = vadd.f32 %v510, %v511
          %v513 = vrot.slane %v512, 1
          %v514 = vadd.f32 %v512, %v513
          %v517 = vcombine.low %v508, %v514
          %v519 = vunpack.c.l.s4 1966171168
          %v520 = vunpack.c.0.s8 %v519
          %v521 = vlaneseq
          %v522 = vshrl.u32 %v521, 7
          %v523 = vsub.s32 %v520, %v522
          %v524 = vrot.slane %v517, %v523
          %v526 = vunpack.c.l.s4 1966171168
          %v527 = vunpack.c.0.s8 %v526
          %v528 = vlaneseq
          %v529 = vshrl.u32 %v528, 7
          %v530 = vsub.s32 %v527, %v529
          %v531 = vrot.slane %v524, %v530
          %v533 = vadd.f32 %v500, %v531
          %v534 = vlaneseq
          %vm535 = vcmp.ge.s32.totalorder %v534, 0
          %vm536 = vcmp.lt.s32.totalorder %v534, 256
          %vm537 = vmand %vm535, %vm536
          %538 = vst.msk [vmem:[%s342] sm:$0x3] %vm537, %v533
        $region60: #{tpu_custom_call.1} parent=39 // pred_fallthru
          _
        %p539 = scmp.eq.s32.totalorder %s37, 1
        // Predicated region
        $region61: #{tpu_custom_call.1} parent=39 // pred_check
          %p540 = pneg %p539
        $region62: #{tpu_custom_call.1} parent=39 // pred_check_branch
          %542 = sbr.rel (%p540) target = $region64
        $region63: #{tpu_custom_call.1} parent=39 // pred_region
          %v543 = vld [vmem:[#allocation2] sm:$0xff]
          %v544 = vld [vmem:[#allocation2 + $0x8] sm:$0xff]
          %v545 = vld [vmem:[%s342] sm:$0x3]
          %v546 = vmul.f32 %v543, %v489
          %v547 = vmul.f32 %v544, %v490
          %v548 = vrot.slane %v546, 4
          %v549 = vadd.f32 %v546, %v548
          %v550 = vrot.slane %v549, 2
          %v551 = vadd.f32 %v549, %v550
          %v552 = vrot.slane %v551, 1
          %v553 = vadd.f32 %v551, %v552
          %v554 = vrot.slane %v547, 4
          %v555 = vadd.f32 %v547, %v554
          %v556 = vrot.slane %v555, 2
          %v557 = vadd.f32 %v555, %v556
          %v558 = vrot.slane %v557, 1
          %v559 = vadd.f32 %v557, %v558
          %v562 = vcombine.low %v553, %v559
          %v564 = vunpack.c.l.s4 1966171168
          %v565 = vunpack.c.0.s8 %v564
          %v566 = vlaneseq
          %v567 = vshrl.u32 %v566, 7
          %v568 = vsub.s32 %v565, %v567
          %v569 = vrot.slane %v562, %v568
          %v571 = vunpack.c.l.s4 1966171168
          %v572 = vunpack.c.0.s8 %v571
          %v573 = vlaneseq
          %v574 = vshrl.u32 %v573, 7
          %v575 = vsub.s32 %v572, %v574
          %v576 = vrot.slane %v569, %v575
          %v578 = vadd.f32 %v545, %v576
          %v579 = vlaneseq
          %vm580 = vcmp.ge.s32.totalorder %v579, 0
          %vm581 = vcmp.lt.s32.totalorder %v579, 256
          %vm582 = vmand %vm580, %vm581
          %583 = vst.msk [vmem:[%s342] sm:$0x3] %vm582, %v578
        $region64: #{tpu_custom_call.1} parent=39 // pred_fallthru
          _
        %p584 = scmp.ge.s32.totalorder %s37, 2
        // Predicated region
        $region65: #{tpu_custom_call.1} parent=39 // pred_check
          %p585 = pneg %p584
        $region66: #{tpu_custom_call.1} parent=39 // pred_check_branch
          %587 = sbr.rel (%p585) target = $region68
        $region67: #{tpu_custom_call.1} parent=39 // pred_region
          %v588 = vld [vmem:[#allocation3] sm:$0xff]
          %v589 = vld [vmem:[#allocation3 + $0x8] sm:$0xff]
          %v590 = vld [vmem:[%s342] sm:$0x3]
          %v591 = vmul.f32 %v588, %v489
          %v592 = vmul.f32 %v589, %v490
          %v593 = vrot.slane %v591, 4
          %v594 = vadd.f32 %v591, %v593
          %v595 = vrot.slane %v594, 2
          %v596 = vadd.f32 %v594, %v595
          %v597 = vrot.slane %v596, 1
          %v598 = vadd.f32 %v596, %v597
          %v599 = vrot.slane %v592, 4
          %v600 = vadd.f32 %v592, %v599
          %v601 = vrot.slane %v600, 2
          %v602 = vadd.f32 %v600, %v601
          %v603 = vrot.slane %v602, 1
          %v604 = vadd.f32 %v602, %v603
          %v607 = vcombine.low %v598, %v604
          %v609 = vunpack.c.l.s4 1966171168
          %v610 = vunpack.c.0.s8 %v609
          %v611 = vlaneseq
          %v612 = vshrl.u32 %v611, 7
          %v613 = vsub.s32 %v610, %v612
          %v614 = vrot.slane %v607, %v613
          %v616 = vunpack.c.l.s4 1966171168
          %v617 = vunpack.c.0.s8 %v616
          %v618 = vlaneseq
          %v619 = vshrl.u32 %v618, 7
          %v620 = vsub.s32 %v617, %v619
          %v621 = vrot.slane %v614, %v620
          %v623 = vadd.f32 %v590, %v621
          %v624 = vlaneseq
          %vm625 = vcmp.ge.s32.totalorder %v624, 0
          %vm626 = vcmp.lt.s32.totalorder %v624, 256
          %vm627 = vmand %vm625, %vm626
          %628 = vst.msk [vmem:[%s342] sm:$0x3] %vm627, %v623
        $region68: #{tpu_custom_call.1} parent=39 // pred_fallthru
          _
        %s629 = sand.u32 %s169, 1
        %s630 = scalar_lea.sflag [#allocation7], %s629
        %s631 = sand.u32 %s169, 1
        %s632 = smul.addr %s631, 2
        %s633 = scalar_lea.vmem [#allocation12], %s632
        %s634 = sand.u32 %s195, 1
        %s635 = scalar_lea.sflag [#allocation14], %s634
        %s636 = sand.u32 %s195, 1
        %s637 = smul.addr %s636, 2
        %s638 = scalar_lea.vmem [#allocation13], %s637
        // Predicated region
        $region69: #{tpu_custom_call.1} parent=39 // pred_check
          %p639 = pneg %p179
        $region70: #{tpu_custom_call.1} parent=39 // pred_check_branch
          %641 = sbr.rel (%p639) target = $region72
        $region71: #{tpu_custom_call.1} parent=39 // pred_region
          %s643 = ssub.s32 32, 32
          %644 = vsyncadd %s630, %s643
          %s645 = smul.addr %s36, 2
          %s646 = smul.addr %s645, 16
          %s647 = scalar_lea.hbm %s5, %s646
          %s649 = sshll.u32 %s633, 4
          %s650 = int_to_ptr.vmem [resolvable:$true] %s649
          %652 = dma.vmem_to_hbm [thread:$0]  %s650, 32, %s647, %s630
        $region72: #{tpu_custom_call.1} parent=39 // pred_fallthru
          _
        // Predicated region
        $region73: #{tpu_custom_call.1} parent=39 // pred_check
          %p653 = pneg %p205
        $region74: #{tpu_custom_call.1} parent=39 // pred_check_branch
          %655 = sbr.rel (%p653) target = $region76
        $region75: #{tpu_custom_call.1} parent=39 // pred_region
          %s657 = ssub.s32 32, 32
          %658 = vsyncadd %s635, %s657
          %s659 = smul.addr %s36, 2
          %s660 = smul.addr %s659, 16
          %s661 = scalar_lea.hbm %s6, %s660
          %s663 = sshll.u32 %s638, 4
          %s664 = int_to_ptr.vmem [resolvable:$true] %s663
          %666 = dma.vmem_to_hbm [thread:$0]  %s664, 32, %s661, %s635
        $region76: #{tpu_custom_call.1} parent=39 // pred_fallthru
          _
      $region40: #{tpu_custom_call.1} parent=5 // pred_fallthru
        _
      %p667 = scmp.le.s32.totalorder 2, %s27
      // Predicated region
      $region77: #{tpu_custom_call.1} parent=5 // pred_check
        %p668 = pneg %p667
      $region78: #{tpu_custom_call.1} parent=5 // pred_check_branch
        %670 = sbr.rel (%p668) target = $region80
      $region79: #{tpu_custom_call.1} parent=5 // pred_region
        %s671 = ssub.s32 %s27, 2
        // Predicated region
        $region81: #{tpu_custom_call.1} parent=79 // pred_check
          %p672 = pneg %p185
        $region82: #{tpu_custom_call.1} parent=79 // pred_check_branch
          %674 = sbr.rel (%p672) target = $region84
        $region83: #{tpu_custom_call.1} parent=79 // pred_region
          %s675 = sand.u32 %s170, 1
          %s676 = scalar_lea.sflag [#allocation7], %s675
          %s677 = sand.u32 %s170, 1
          %s678 = smul.addr %s677, 2
          %s679 = scalar_lea.vmem [#allocation12], %s678
          %680 = dma.done %s676, 32
        $region84: #{tpu_custom_call.1} parent=79 // pred_fallthru
          _
        // Predicated region
        $region85: #{tpu_custom_call.1} parent=79 // pred_check
          %p681 = pneg %p211
        $region86: #{tpu_custom_call.1} parent=79 // pred_check_branch
          %683 = sbr.rel (%p681) target = $region88
        $region87: #{tpu_custom_call.1} parent=79 // pred_region
          %s684 = sand.u32 %s196, 1
          %s685 = scalar_lea.sflag [#allocation14], %s684
          %s686 = sand.u32 %s196, 1
          %s687 = smul.addr %s686, 2
          %s688 = scalar_lea.vmem [#allocation13], %s687
          %689 = dma.done %s685, 32
        $region88: #{tpu_custom_call.1} parent=79 // pred_fallthru
          _
      $region80: #{tpu_custom_call.1} parent=5 // pred_fallthru
        _
    $region6: #{tpu_custom_call.1} parent=1 // loop_footer
      %s31 = sadd.s32 1, %s27
    $region7: #{tpu_custom_call.1} parent=1 // loop_footer_branch
      %26 = sbr.rel target = $region3
    $region8: #{tpu_custom_call.1} parent=1 // loop_exit
      _
    %690 = vsyncpa [#allocation6], 1
    %s691 = scalar_lea.sflag [#allocation6], 1
    %692 = vsyncpa %s691, 1
    %693 = vsyncpa [#allocation11], 1
    %s694 = scalar_lea.sflag [#allocation11], 1
    %695 = vsyncpa %s694, 1
    %696 = vsyncpa [#allocation7], 1
    %s697 = scalar_lea.sflag [#allocation7], 1
    %698 = vsyncpa %s697, 1
    %699 = vsyncpa [#allocation14], 1
    %s700 = scalar_lea.sflag [#allocation14], 1
    %701 = vsyncpa %s700, 1
    %702 = vsyncpa [#allocation8], 1
    %s703 = scalar_lea.sflag [#allocation8], 1
    %704 = vsyncpa %s703, 1

</llo_original>
